<compile_context>
chip_gen: v7x
topology: tpu7x:2x2x1
jax: 0.10.0
libtpu: 0.0.40
codegen_flags: <defaults>
</compile_context>

<pallas_src>
import jax
import jax.numpy as jnp
import numpy as np
from jax.experimental import pallas as pl
from jax.experimental.pallas import tpu as pltpu


def _round_up(x, m):
    return ((x + m - 1) // m) * m


def _pick_batch_tile(B, sub, out_row_bytes):
    """Batch tile: ~4 MiB output block, >= 8 (ideally even) grid steps."""
    target = 4 * 1024 * 1024
    tb = max(sub, (target // out_row_bytes) // sub * sub)
    tb = min(tb, _round_up(B, sub))
    # Keep >= 8 grid steps (pipeline slack, >= 4 per v7x TC) when B allows,
    # else >= 2 steps so both v7x TensorCores get work.
    if B >= 8 * sub:
        tb = min(tb, max(sub, (B // 8) // sub * sub))
    elif B >= 2 * sub:
        tb = min(tb, max(sub, (B // 2) // sub * sub))
    # Prefer an even number of grid steps (v7x: 2 TCs share the batch axis);
    # only shrink the tile if that actually achieves evenness.
    steps = pl.cdiv(B, tb)
    if steps > 1 and steps % 2 == 1:
        t = tb - sub
        while t >= sub:
            if pl.cdiv(B, t) % 2 == 0:
                tb = t
                break
            t -= sub
    return tb


def _feature_tokenizer_kernel_3d(x_ref, w_ref, b_ref, o_ref):
    # x_ref: (tb, F)  w_ref/b_ref: (F, D)  o_ref: (tb, F, D)   (D % 128 == 0)
    x = x_ref[...].astype(jnp.float32)
    w = w_ref[...].astype(jnp.float32)
    b = b_ref[...].astype(jnp.float32)
    out = x[:, :, None] * w[None, :, :] + b[None, :, :]   # VPU broadcast FMA
    o_ref[...] = out.astype(o_ref.dtype)                  # cast only at store


def _make_flat_kernel(F, D):
    """Kernel writing a flattened (tb, F*D) output block: lane/sublane dense
    even when D is not a multiple of 128 or F not a multiple of 8."""
    def kernel(x_ref, w_ref, b_ref, o_ref):
        # x_ref: (tb, F)  w_ref/b_ref: (F, D)  o_ref: (tb, F*D)
        x = x_ref[...].astype(jnp.float32)
        for f in range(F):   # F = #tabular features (small) -> fully unrolled
            xf = x[:, f:f + 1]                                  # (tb, 1)
            wf = w_ref[f:f + 1, :].astype(jnp.float32)          # (1, D)
            bf = b_ref[f:f + 1, :].astype(jnp.float32)          # (1, D)
            o_ref[:, f * D:(f + 1) * D] = (xf * wf + bf).astype(o_ref.dtype)
    return kernel


def feature_tokenizer(x, weight, bias, *, out_dtype=None, tb=None):
    """x: (B, F); weight/bias: (F, D) -> (B, F, D) (same semantics as PyTorch)."""
    B, F = x.shape
    F_w, D = weight.shape
    assert F == F_w and bias.shape == (F, D)
    # out_dtype follows x.dtype: bf16 inputs -> bf16 output (halves writeback).
    out_dtype = x.dtype if out_dtype is None else jnp.dtype(out_dtype)
    out_itemsize = np.dtype(out_dtype).itemsize
    x_itemsize = np.dtype(x.dtype).itemsize
    w_itemsize = np.dtype(weight.dtype).itemsize

    # Lane-dense flattened output path whenever the natural (tb, F, D) block
    # would be lane/sublane padded. (For very large F the unrolled per-feature
    # loop is not worth it; fall back to the 3D path with masked stores.)
    flatten = ((D % 128 != 0) or (F % 8 != 0)) and F <= 128

    # Sublane multiple for the batch-tile dim (16 for 16-bit dtypes).
    sub = 16 if min(out_itemsize, x_itemsize) < 4 else 8

    if flatten:
        out_row_vmem = _round_up(F * D, 128) * out_itemsize
    else:
        out_row_vmem = _round_up(F, 8) * _round_up(D, 128) * out_itemsize

    if tb is None:
        tb = _pick_batch_tile(B, sub, out_row_vmem)
    else:
        tb = max(sub, _round_up(tb, sub))

    grid = (pl.cdiv(B, tb),)   # edge block (if any): padded read, masked write

    # Exact VMEM budget for the pipelined blocks; stay at 32 MiB scoped limit
    # unless the blocks genuinely need more (headroom on v7x's 64 MiB part).
    out_block_bytes = tb * out_row_vmem
    x_block_bytes = _round_up(tb, 8) * _round_up(F, 128) * x_itemsize
    const_block_bytes = 2 * _round_up(F, 8) * _round_up(D, 128) * w_itemsize
    need = 2 * (out_block_bytes + x_block_bytes) + 2 * const_block_bytes + (2 << 20)
    vmem_limit = max(32 * 1024 * 1024, int(need))

    cost = pl.CostEstimate(
        flops=2 * B * F * D,
        transcendentals=0,
        bytes_accessed=(x.size * x_itemsize
                        + weight.size * w_itemsize
                        + bias.size * np.dtype(bias.dtype).itemsize
                        + B * F * D * out_itemsize),
    )

    if flatten:
        out_shape = jax.ShapeDtypeStruct((B, F * D), out_dtype)
        out_spec = pl.BlockSpec((tb, F * D), lambda i: (i, 0))
        kernel = _make_flat_kernel(F, D)
    else:
        out_shape = jax.ShapeDtypeStruct((B, F, D), out_dtype)
        out_spec = pl.BlockSpec((tb, F, D), lambda i: (i, 0, 0))
        kernel = _feature_tokenizer_kernel_3d

    out = pl.pallas_call(
        kernel,
        out_shape=out_shape,
        grid_spec=pltpu.PrefetchScalarGridSpec(
            num_scalar_prefetch=0,
            grid=grid,
            in_specs=[
                pl.BlockSpec((tb, F), lambda i: (i, 0)),   # x batch tile
                pl.BlockSpec((F, D), lambda i: (0, 0)),    # weight (resident)
                pl.BlockSpec((F, D), lambda i: (0, 0)),    # bias   (resident)
            ],
            out_specs=out_spec,
        ),
        compiler_params=pltpu.CompilerParams(
            dimension_semantics=("parallel",),
            vmem_limit_bytes=vmem_limit,
        ),
        cost_estimate=cost,
    )(x, weight, bias)

    if flatten:
        out = out.reshape(B, F, D)   # row-major collapse: metadata-only
    return out


if __name__ == "__main__":
    key = jax.random.PRNGKey(0)

    # Case 1: lane-aligned D (multiple of 128) -> direct (tb, F, D) blocks.
    B, F, D = 256, 8, 128
    k1, k2, k3, key = jax.random.split(key, 4)
    x = jax.random.normal(k1, (B, F), dtype=jnp.float32)
    weight = jax.random.normal(k2, (F, D), dtype=jnp.float32)   # ~ torch.randn
    bias = jax.random.normal(k3, (F, D), dtype=jnp.float32)     # ~ torch.randn
    out = jax.block_until_ready(feature_tokenizer(x, weight, bias))
    ref = x[..., None] * weight + bias
    assert out.shape == (B, F, D)
    assert jnp.allclose(out, ref, atol=1e-6, rtol=1e-6)

    # Case 2: realistic FT-Transformer-ish shapes (D=192, F=7) and a ragged
    # batch -> flattened lane-dense output path + cdiv grid with masked edge.
    B2, F2, D2 = 250, 7, 192
    k1, k2, k3, key = jax.random.split(key, 4)
    x2 = jax.random.normal(k1, (B2, F2), dtype=jnp.float32)
    w2 = jax.random.normal(k2, (F2, D2), dtype=jnp.float32)
    b2 = jax.random.normal(k3, (F2, D2), dtype=jnp.float32)
    out2 = jax.block_until_ready(feature_tokenizer(x2, w2, b2))
    ref2 = x2[..., None] * w2 + b2
    assert out2.shape == (B2, F2, D2)
    assert jnp.allclose(out2, ref2, atol=1e-6, rtol=1e-6)

    print("KERNEL_OK")
</pallas_src>

<mosaic_0001>
module attributes {stable_mosaic.version = 11 : i64} {
  func.func @_feature_tokenizer_kernel_3d(%arg0: i32, %arg1: memref<32x8xf32, #tpu.memory_space<vmem>>, %arg2: memref<8x128xf32, #tpu.memory_space<vmem>>, %arg3: memref<8x128xf32, #tpu.memory_space<vmem>>, %arg4: memref<32x8x128xf32, #tpu.memory_space<vmem>>) attributes {dimension_semantics = [#tpu.dimension_semantics<parallel>], iteration_bounds = array<i64: 8>, scalar_prefetch = 0 : i64, scratch_operands = 0 : i64, tpu.core_type = #tpu.core_type<tc>, window_params = [{transform_indices = @transform_0, window_bounds = array<i64: 32, 8>}, {pipeline_mode = #tpu.pipeline_mode<synchronous>, transform_indices = @transform_1, window_bounds = array<i64: 8, 128>}, {pipeline_mode = #tpu.pipeline_mode<synchronous>, transform_indices = @transform_2, window_bounds = array<i64: 8, 128>}, {transform_indices = @transform_3, window_bounds = array<i64: 32, 8, 128>}]} {
    %c0 = arith.constant 0 : index
    %c0_0 = arith.constant 0 : index
    %0 = vector.load %arg1[%c0, %c0_0] : memref<32x8xf32, #tpu.memory_space<vmem>>, vector<32x8xf32>
    %c0_1 = arith.constant 0 : index
    %c0_2 = arith.constant 0 : index
    %1 = vector.load %arg2[%c0_1, %c0_2] : memref<8x128xf32, #tpu.memory_space<vmem>>, vector<8x128xf32>
    %c0_3 = arith.constant 0 : index
    %c0_4 = arith.constant 0 : index
    %2 = vector.load %arg3[%c0_3, %c0_4] : memref<8x128xf32, #tpu.memory_space<vmem>>, vector<8x128xf32>
    %3 = vector.shape_cast %0 : vector<32x8xf32> to vector<32x8x1xf32>
    %4 = vector.shape_cast %1 : vector<8x128xf32> to vector<1x8x128xf32>
    %5 = vector.broadcast %3 : vector<32x8x1xf32> to vector<32x8x128xf32>
    %6 = vector.broadcast %4 : vector<1x8x128xf32> to vector<32x8x128xf32>
    %7 = arith.mulf %5, %6 : vector<32x8x128xf32>
    %8 = vector.shape_cast %2 : vector<8x128xf32> to vector<1x8x128xf32>
    %9 = vector.broadcast %8 : vector<1x8x128xf32> to vector<32x8x128xf32>
    %10 = arith.addf %7, %9 : vector<32x8x128xf32>
    %c0_5 = arith.constant 0 : index
    %c0_6 = arith.constant 0 : index
    %c0_7 = arith.constant 0 : index
    %11 = vector.load %arg4[%c0_5, %c0_6, %c0_7] : memref<32x8x128xf32, #tpu.memory_space<vmem>>, vector<32x8x128xf32>
    tpu.vector_store %arg4[%c0_5, %c0_6, %c0_7], %10 {strides = array<i32>} : memref<32x8x128xf32, #tpu.memory_space<vmem>>, vector<32x8x128xf32>,
    return
  }
  func.func @transform_0(%arg0: i32) -> (i32, i32) {
    %c0_i32 = arith.constant 0 : i32
    %c0_i32_0 = arith.constant 0 : i32
    return %arg0, %c0_i32 : i32, i32
  }
  func.func @transform_1(%arg0: i32) -> (i32, i32) {
    %c0_i32 = arith.constant 0 : i32
    %c0_i32_0 = arith.constant 0 : i32
    %c0_i32_1 = arith.constant 0 : i32
    return %c0_i32, %c0_i32_0 : i32, i32
  }
  func.func @transform_2(%arg0: i32) -> (i32, i32) {
    %c0_i32 = arith.constant 0 : i32
    %c0_i32_0 = arith.constant 0 : i32
    %c0_i32_1 = arith.constant 0 : i32
    return %c0_i32, %c0_i32_0 : i32, i32
  }
  func.func @transform_3(%arg0: i32) -> (i32, i32, i32) {
    %c0_i32 = arith.constant 0 : i32
    %c0_i32_0 = arith.constant 0 : i32
    %c0_i32_1 = arith.constant 0 : i32
    return %arg0, %c0_i32, %c0_i32_0 : i32, i32, i32
  }
}

</mosaic_0001>

<llo_original>
// kernel: tpu_custom_call.1
$region0: #{tpu_custom_call.1}
  #allocation0 [shape = 'u32[]', space=smem, size = 0x4, offset = 0x4, fixed_abs, tag = 'smem constant byte address 0x4 - core index']
  #allocation1 [shape = 'u32[144,128]{1,0:T(1,128)}', space=vmem, size = 0x12000, scoped, tag = 'internal scratch']
  %s0 = inlined_call_operand.vmem [shape: f32[256,8], index: 0, kind: input, shape index: {}]
  %s1 = inlined_call_operand.vmem [shape: f32[8,128], index: 1, kind: input, shape index: {}]
  %s2 = inlined_call_operand.vmem [shape: f32[8,128], index: 2, kind: input, shape index: {}]
  %s3 = inlined_call_operand.hbm [shape: f32[256,8,128], index: 3, kind: output, shape index: {}]
  %s4 = sld [smem:[#allocation0]]
  $region45: #{tpu_custom_call.1} parent=0
    _
  %s6 = ssub.s32 1, %s4
  %s7 = scalar_select 0, %s6, %s4
  $region1: #{tpu_custom_call.1} parent=0
    #allocation2 [shape = 'u8[262144]{0}', space=vmem, size = 0x40000, scoped, tag = 'output window, operand 0']
    #allocation3 [shape = 's32[2]{0}', space=sflag, size = 0x8, scoped, tag = 'scoped memory for tpu_custom_call.1']
    %8 = vsyncpa [#allocation3], 0
    %s9 = scalar_lea.sflag [#allocation3], 1
    %10 = vsyncpa %s9, 0
    loop: start=0, step=1, limit=10
    $region2: #{tpu_custom_call.1} parent=1 // loop_pre_header
      _
    $region3: #{tpu_custom_call.1} parent=1 // loop_header
      %s12 = sphi 0, %s16
      %p13 = scmp.ge.s32.totalorder %s12, 10
      %s22 = sphi 0, %s24
      %s25 = sphi 0, %s22
      %s26 = sphi 0, %s25
      %s42 = sphi 0, %s26
      %s46 = sphi 0, %s46
      %s48 = sphi 0, %s46
      %s49 = sphi 0, %s48
      %s63 = sphi 0, %s49
      %s67 = sphi 0, %s67
      %s69 = sphi 0, %s67
      %s70 = sphi 0, %s69
      %s84 = sphi 0, %s70
      %s90 = sphi 0, %s92
      %s93 = sphi 0, %s90
      %s94 = sphi 0, %s93
      %s110 = sphi 0, %s94
    $region4: #{tpu_custom_call.1} parent=1 // loop_header_branch
      %15 = sbr.rel (%p13) target = $region8
    $region5: #{tpu_custom_call.1} parent=1 // loop_body
      %s17 = ssub.s32 %s12, 1
      %s18 = ssub.s32 %s12, 2
      %s19 = sadd.s32 %s12, 1
      %s20 = ssub.s32 %s12, %s19
      %p21 = scmp.eq.s32.totalorder %s20, 0
      %s23 = sadd.s32 %s22, 1
      %s24 = scalar_select %p21, %s22, %s23
      %p27 = pneg %p21
      %p28 = scmp.eq.s32.totalorder %s12, 7
      %p29 = por %p27, %p28
      %p30 = scmp.ne.s32.totalorder %s22, %s25
      %p31 = scmp.eq.s32.totalorder %s12, 0
      %p32 = por %p30, %p31
      %p33 = scmp.ne.s32.totalorder %s22, %s25
      %p34 = scmp.eq.s32.totalorder %s17, 7
      %p35 = por %p33, %p34
      %p36 = scmp.ne.s32.totalorder %s25, %s26
      %p37 = scmp.eq.s32.totalorder %s17, 0
      %p38 = por %p36, %p37
      %p39 = scmp.ne.s32.totalorder %s25, %s26
      %p40 = scmp.eq.s32.totalorder %s18, 7
      %p41 = por %p39, %p40
      %p43 = scmp.ne.s32.totalorder %s26, %s42
      %p44 = scmp.eq.s32.totalorder %s18, 0
      %p45 = por %p43, %p44
      %s47 = sadd.s32 %s46, 1
      %p50 = scmp.eq.s32.totalorder %s12, 7
      %p51 = scmp.ne.s32.totalorder %s46, %s48
      %p52 = scmp.eq.s32.totalorder %s12, 0
      %p53 = por %p51, %p52
      %p54 = scmp.ne.s32.totalorder %s46, %s48
      %p55 = scmp.eq.s32.totalorder %s17, 7
      %p56 = por %p54, %p55
      %p57 = scmp.ne.s32.totalorder %s48, %s49
      %p58 = scmp.eq.s32.totalorder %s17, 0
      %p59 = por %p57, %p58
      %p60 = scmp.ne.s32.totalorder %s48, %s49
      %p61 = scmp.eq.s32.totalorder %s18, 7
      %p62 = por %p60, %p61
      %p64 = scmp.ne.s32.totalorder %s49, %s63
      %p65 = scmp.eq.s32.totalorder %s18, 0
      %p66 = por %p64, %p65
      %s68 = sadd.s32 %s67, 1
      %p71 = scmp.eq.s32.totalorder %s12, 7
      %p72 = scmp.ne.s32.totalorder %s67, %s69
      %p73 = scmp.eq.s32.totalorder %s12, 0
      %p74 = por %p72, %p73
      %p75 = scmp.ne.s32.totalorder %s67, %s69
      %p76 = scmp.eq.s32.totalorder %s17, 7
      %p77 = por %p75, %p76
      %p78 = scmp.ne.s32.totalorder %s69, %s70
      %p79 = scmp.eq.s32.totalorder %s17, 0
      %p80 = por %p78, %p79
      %p81 = scmp.ne.s32.totalorder %s69, %s70
      %p82 = scmp.eq.s32.totalorder %s18, 7
      %p83 = por %p81, %p82
      %p85 = scmp.ne.s32.totalorder %s70, %s84
      %p86 = scmp.eq.s32.totalorder %s18, 0
      %p87 = por %p85, %p86
      %s88 = ssub.s32 %s12, %s19
      %p89 = scmp.eq.s32.totalorder %s88, 0
      %s91 = sadd.s32 %s90, 1
      %s92 = scalar_select %p89, %s90, %s91
      %p95 = pneg %p89
      %p96 = scmp.eq.s32.totalorder %s12, 7
      %p97 = por %p95, %p96
      %p98 = scmp.ne.s32.totalorder %s90, %s93
      %p99 = scmp.eq.s32.totalorder %s12, 0
      %p100 = por %p98, %p99
      %p101 = scmp.ne.s32.totalorder %s90, %s93
      %p102 = scmp.eq.s32.totalorder %s17, 7
      %p103 = por %p101, %p102
      %p104 = scmp.ne.s32.totalorder %s93, %s94
      %p105 = scmp.eq.s32.totalorder %s17, 0
      %p106 = por %p104, %p105
      %p107 = scmp.ne.s32.totalorder %s93, %s94
      %p108 = scmp.eq.s32.totalorder %s18, 7
      %p109 = por %p107, %p108
      %p111 = scmp.ne.s32.totalorder %s94, %s110
      %p112 = scmp.eq.s32.totalorder %s18, 0
      %p113 = por %p111, %p112
      %p114 = scmp.le.s32.totalorder 1, %s12
      %p115 = scmp.lt.s32.totalorder %s12, 9
      %p116 = pnand %p114, %p115
      %p117 = pneg %p116
      // Predicated region
      $region9: #{tpu_custom_call.1} parent=5 // pred_check
        _
      $region10: #{tpu_custom_call.1} parent=5 // pred_check_branch
        %119 = sbr.rel (%p116) target = $region12
      $region11: #{tpu_custom_call.1} parent=5 // pred_region
        %s120 = ssub.s32 %s12, 1
        // Predicated region
        $region13: #{tpu_custom_call.1} parent=11 // pred_check
          %p121 = pneg %p59
        $region14: #{tpu_custom_call.1} parent=11 // pred_check_branch
          %123 = sbr.rel (%p121) target = $region16
        $region15: #{tpu_custom_call.1} parent=11 // pred_region
          _
        $region16: #{tpu_custom_call.1} parent=11 // pred_fallthru
          _
        // Predicated region
        $region17: #{tpu_custom_call.1} parent=11 // pred_check
          %p124 = pneg %p80
        $region18: #{tpu_custom_call.1} parent=11 // pred_check_branch
          %126 = sbr.rel (%p124) target = $region20
        $region19: #{tpu_custom_call.1} parent=11 // pred_region
          _
        $region20: #{tpu_custom_call.1} parent=11 // pred_fallthru
          _
      $region12: #{tpu_custom_call.1} parent=5 // pred_fallthru
        _
      %p127 = scmp.lt.s32.totalorder %s12, 8
      // Predicated region
      $region21: #{tpu_custom_call.1} parent=5 // pred_check
        %p128 = pneg %p127
      $region22: #{tpu_custom_call.1} parent=5 // pred_check_branch
        %130 = sbr.rel (%p128) target = $region24
      $region23: #{tpu_custom_call.1} parent=5 // pred_region
        // Predicated region
        $region25: #{tpu_custom_call.1} parent=23 // pred_check
          %p131 = pneg %p32
        $region26: #{tpu_custom_call.1} parent=23 // pred_check_branch
          %133 = sbr.rel (%p131) target = $region28
        $region27: #{tpu_custom_call.1} parent=23 // pred_region
          %s134 = smul.u32 4, %s12
          %p135 = scmp.lt.s32.totalorder %s134, 31
          %s136 = scalar_select %p135, %s134, 31
          %s137 = smul.addr %s136, 8
          %s138 = scalar_lea.vmem %s0, %s137
          %s139 = smul.u32 4, %s12
        $region28: #{tpu_custom_call.1} parent=23 // pred_fallthru
          _
      $region24: #{tpu_custom_call.1} parent=5 // pred_fallthru
        _
      %p140 = scmp.le.s32.totalorder 1, %s12
      %p141 = scmp.lt.s32.totalorder %s12, 9
      %p142 = pnand %p140, %p141
      %p143 = pneg %p142
      // Predicated region
      $region29: #{tpu_custom_call.1} parent=5 // pred_check
        _
      $region30: #{tpu_custom_call.1} parent=5 // pred_check_branch
        %145 = sbr.rel (%p142) target = $region32
      $region31: #{tpu_custom_call.1} parent=5 // pred_region
        %s146 = ssub.s32 %s12, 1
        %s147 = smul.u32 4, %s17
        %p148 = scmp.lt.s32.totalorder %s147, 31
        %s149 = scalar_select %p148, %s147, 31
        %s150 = smul.addr %s149, 8
        %s151 = scalar_lea.vmem %s0, %s150
        %p152 = pneg %p38
        %p153 = pneg %p35
        %p154 = pneg %p59
        %p155 = pneg %p56
        %p156 = pneg %p80
        %p157 = pneg %p77
        %p158 = pneg %p106
        %p159 = pneg %p103
        %s160 = sand.u32 %s93, 1
        %s161 = scalar_lea.sflag [#allocation3], %s160
        %s162 = sand.u32 %s93, 1
        %s163 = smul.addr %s162, 256
        %s164 = scalar_lea.vmem [#allocation2], %s163
        %s165 = smul.u32 4, %s17
        %p166 = scmp.lt.s32.totalorder %s165, 31
        %s167 = scalar_select %p166, %s165, 31
        %s168 = smul.addr %s167, 8
        %s169 = scalar_lea.vmem %s0, %s168
        %s170 = smul.u32 4, %s17
        %s171 = smul.u32 32, %s17
        %v172 = vld [vmem:[%s169] sm:$0xff]
        %v173 = vld [vmem:[%s169 + $0x8] sm:$0xff]
        %v174 = vld [vmem:[%s169 + $0x10] sm:$0xff]
        %v175 = vld [vmem:[%s169 + $0x18] sm:$0xff]
        %v176 = vld [vmem:[%s1] sm:$0xff]
        %v177 = vld [vmem:[%s2] sm:$0xff]
        %v178 = vlaneseq
        %v179 = vshrl.u32 %v178, 7
        %v180 = vsub.s32 0, %v179
        %v181 = vrot.slane %v172, %v180
        %183 = vbcast.lane.b32.xlu0 %v181, 256
        %v184 = vpop.permute.xlu0 %183
        %v185 = vlaneseq
        %v186 = vshrl.u32 %v185, 7
        %v187 = vsub.s32 1, %v186
        %v188 = vrot.slane %v172, %v187
        %190 = vbcast.lane.b32.xlu0 %v188, 256
        %v191 = vpop.permute.xlu0 %190
        %v192 = vlaneseq
        %v193 = vshrl.u32 %v192, 7
        %v194 = vsub.s32 2, %v193
        %v195 = vrot.slane %v172, %v194
        %197 = vbcast.lane.b32.xlu0 %v195, 256
        %v198 = vpop.permute.xlu0 %197
        %v199 = vlaneseq
        %v200 = vshrl.u32 %v199, 7
        %v201 = vsub.s32 3, %v200
        %v202 = vrot.slane %v172, %v201
        %204 = vbcast.lane.b32.xlu0 %v202, 256
        %v205 = vpop.permute.xlu0 %204
        %v206 = vlaneseq
        %v207 = vshrl.u32 %v206, 7
        %v208 = vsub.s32 4, %v207
        %v209 = vrot.slane %v172, %v208
        %211 = vbcast.lane.b32.xlu0 %v209, 256
        %v212 = vpop.permute.xlu0 %211
        %v213 = vlaneseq
        %v214 = vshrl.u32 %v213, 7
        %v215 = vsub.s32 5, %v214
        %v216 = vrot.slane %v172, %v215
        %218 = vbcast.lane.b32.xlu0 %v216, 256
        %v219 = vpop.permute.xlu0 %218
        %v220 = vlaneseq
        %v221 = vshrl.u32 %v220, 7
        %v222 = vsub.s32 6, %v221
        %v223 = vrot.slane %v172, %v222
        %225 = vbcast.lane.b32.xlu0 %v223, 256
        %v226 = vpop.permute.xlu0 %225
        %v227 = vlaneseq
        %v228 = vshrl.u32 %v227, 7
        %v229 = vsub.s32 7, %v228
        %v230 = vrot.slane %v172, %v229
        %232 = vbcast.lane.b32.xlu0 %v230, 256
        %v233 = vpop.permute.xlu0 %232
        %v234 = vlaneseq
        %v235 = vshrl.u32 %v234, 7
        %v236 = vsub.s32 0, %v235
        %v237 = vrot.slane %v173, %v236
        %239 = vbcast.lane.b32.xlu0 %v237, 256
        %v240 = vpop.permute.xlu0 %239
        %v241 = vlaneseq
        %v242 = vshrl.u32 %v241, 7
        %v243 = vsub.s32 1, %v242
        %v244 = vrot.slane %v173, %v243
        %246 = vbcast.lane.b32.xlu0 %v244, 256
        %v247 = vpop.permute.xlu0 %246
        %v248 = vlaneseq
        %v249 = vshrl.u32 %v248, 7
        %v250 = vsub.s32 2, %v249
        %v251 = vrot.slane %v173, %v250
        %253 = vbcast.lane.b32.xlu0 %v251, 256
        %v254 = vpop.permute.xlu0 %253
        %v255 = vlaneseq
        %v256 = vshrl.u32 %v255, 7
        %v257 = vsub.s32 3, %v256
        %v258 = vrot.slane %v173, %v257
        %260 = vbcast.lane.b32.xlu0 %v258, 256
        %v261 = vpop.permute.xlu0 %260
        %v262 = vlaneseq
        %v263 = vshrl.u32 %v262, 7
        %v264 = vsub.s32 4, %v263
        %v265 = vrot.slane %v173, %v264
        %267 = vbcast.lane.b32.xlu0 %v265, 256
        %v268 = vpop.permute.xlu0 %267
        %v269 = vlaneseq
        %v270 = vshrl.u32 %v269, 7
        %v271 = vsub.s32 5, %v270
        %v272 = vrot.slane %v173, %v271
        %274 = vbcast.lane.b32.xlu0 %v272, 256
        %v275 = vpop.permute.xlu0 %274
        %v276 = vlaneseq
        %v277 = vshrl.u32 %v276, 7
        %v278 = vsub.s32 6, %v277
        %v279 = vrot.slane %v173, %v278
        %281 = vbcast.lane.b32.xlu0 %v279, 256
        %v282 = vpop.permute.xlu0 %281
        %v283 = vlaneseq
        %v284 = vshrl.u32 %v283, 7
        %v285 = vsub.s32 7, %v284
        %v286 = vrot.slane %v173, %v285
        %288 = vbcast.lane.b32.xlu0 %v286, 256
        %v289 = vpop.permute.xlu0 %288
        %v290 = vlaneseq
        %v291 = vshrl.u32 %v290, 7
        %v292 = vsub.s32 0, %v291
        %v293 = vrot.slane %v174, %v292
        %295 = vbcast.lane.b32.xlu0 %v293, 256
        %v296 = vpop.permute.xlu0 %295
        %v297 = vlaneseq
        %v298 = vshrl.u32 %v297, 7
        %v299 = vsub.s32 1, %v298
        %v300 = vrot.slane %v174, %v299
        %302 = vbcast.lane.b32.xlu0 %v300, 256
        %v303 = vpop.permute.xlu0 %302
        %v304 = vlaneseq
        %v305 = vshrl.u32 %v304, 7
        %v306 = vsub.s32 2, %v305
        %v307 = vrot.slane %v174, %v306
        %309 = vbcast.lane.b32.xlu0 %v307, 256
        %v310 = vpop.permute.xlu0 %309
        %v311 = vlaneseq
        %v312 = vshrl.u32 %v311, 7
        %v313 = vsub.s32 3, %v312
        %v314 = vrot.slane %v174, %v313
        %316 = vbcast.lane.b32.xlu0 %v314, 256
        %v317 = vpop.permute.xlu0 %316
        %v318 = vlaneseq
        %v319 = vshrl.u32 %v318, 7
        %v320 = vsub.s32 4, %v319
        %v321 = vrot.slane %v174, %v320
        %323 = vbcast.lane.b32.xlu0 %v321, 256
        %v324 = vpop.permute.xlu0 %323
        %v325 = vlaneseq
        %v326 = vshrl.u32 %v325, 7
        %v327 = vsub.s32 5, %v326
        %v328 = vrot.slane %v174, %v327
        %330 = vbcast.lane.b32.xlu0 %v328, 256
        %v331 = vpop.permute.xlu0 %330
        %v332 = vlaneseq
        %v333 = vshrl.u32 %v332, 7
        %v334 = vsub.s32 6, %v333
        %v335 = vrot.slane %v174, %v334
        %337 = vbcast.lane.b32.xlu0 %v335, 256
        %v338 = vpop.permute.xlu0 %337
        %v339 = vlaneseq
        %v340 = vshrl.u32 %v339, 7
        %v341 = vsub.s32 7, %v340
        %v342 = vrot.slane %v174, %v341
        %344 = vbcast.lane.b32.xlu0 %v342, 256
        %v345 = vpop.permute.xlu0 %344
        %v346 = vlaneseq
        %v347 = vshrl.u32 %v346, 7
        %v348 = vsub.s32 0, %v347
        %v349 = vrot.slane %v175, %v348
        %351 = vbcast.lane.b32.xlu0 %v349, 256
        %v352 = vpop.permute.xlu0 %351
        %v353 = vlaneseq
        %v354 = vshrl.u32 %v353, 7
        %v355 = vsub.s32 1, %v354
        %v356 = vrot.slane %v175, %v355
        %358 = vbcast.lane.b32.xlu0 %v356, 256
        %v359 = vpop.permute.xlu0 %358
        %v360 = vlaneseq
        %v361 = vshrl.u32 %v360, 7
        %v362 = vsub.s32 2, %v361
        %v363 = vrot.slane %v175, %v362
        %365 = vbcast.lane.b32.xlu0 %v363, 256
        %v366 = vpop.permute.xlu0 %365
        %v367 = vlaneseq
        %v368 = vshrl.u32 %v367, 7
        %v369 = vsub.s32 3, %v368
        %v370 = vrot.slane %v175, %v369
        %372 = vbcast.lane.b32.xlu0 %v370, 256
        %v373 = vpop.permute.xlu0 %372
        %v374 = vlaneseq
        %v375 = vshrl.u32 %v374, 7
        %v376 = vsub.s32 4, %v375
        %v377 = vrot.slane %v175, %v376
        %379 = vbcast.lane.b32.xlu0 %v377, 256
        %v380 = vpop.permute.xlu0 %379
        %v381 = vlaneseq
        %v382 = vshrl.u32 %v381, 7
        %v383 = vsub.s32 5, %v382
        %v384 = vrot.slane %v175, %v383
        %386 = vbcast.lane.b32.xlu0 %v384, 256
        %v387 = vpop.permute.xlu0 %386
        %v388 = vlaneseq
        %v389 = vshrl.u32 %v388, 7
        %v390 = vsub.s32 6, %v389
        %v391 = vrot.slane %v175, %v390
        %393 = vbcast.lane.b32.xlu0 %v391, 256
        %v394 = vpop.permute.xlu0 %393
        %v395 = vlaneseq
        %v396 = vshrl.u32 %v395, 7
        %v397 = vsub.s32 7, %v396
        %v398 = vrot.slane %v175, %v397
        %400 = vbcast.lane.b32.xlu0 %v398, 256
        %v401 = vpop.permute.xlu0 %400
        %v402 = vmul.f32 %v184, %v176
        %v403 = vmul.f32 %v191, %v176
        %v404 = vmul.f32 %v198, %v176
        %v405 = vmul.f32 %v205, %v176
        %v406 = vmul.f32 %v212, %v176
        %v407 = vmul.f32 %v219, %v176
        %v408 = vmul.f32 %v226, %v176
        %v409 = vmul.f32 %v233, %v176
        %v410 = vmul.f32 %v240, %v176
        %v411 = vmul.f32 %v247, %v176
        %v412 = vmul.f32 %v254, %v176
        %v413 = vmul.f32 %v261, %v176
        %v414 = vmul.f32 %v268, %v176
        %v415 = vmul.f32 %v275, %v176
        %v416 = vmul.f32 %v282, %v176
        %v417 = vmul.f32 %v289, %v176
        %v418 = vmul.f32 %v296, %v176
        %v419 = vmul.f32 %v303, %v176
        %v420 = vmul.f32 %v310, %v176
        %v421 = vmul.f32 %v317, %v176
        %v422 = vmul.f32 %v324, %v176
        %v423 = vmul.f32 %v331, %v176
        %v424 = vmul.f32 %v338, %v176
        %v425 = vmul.f32 %v345, %v176
        %v426 = vmul.f32 %v352, %v176
        %v427 = vmul.f32 %v359, %v176
        %v428 = vmul.f32 %v366, %v176
        %v429 = vmul.f32 %v373, %v176
        %v430 = vmul.f32 %v380, %v176
        %v431 = vmul.f32 %v387, %v176
        %v432 = vmul.f32 %v394, %v176
        %v433 = vmul.f32 %v401, %v176
        %v434 = vadd.f32 %v402, %v177
        %v435 = vadd.f32 %v403, %v177
        %v436 = vadd.f32 %v404, %v177
        %v437 = vadd.f32 %v405, %v177
        %v438 = vadd.f32 %v406, %v177
        %v439 = vadd.f32 %v407, %v177
        %v440 = vadd.f32 %v408, %v177
        %v441 = vadd.f32 %v409, %v177
        %v442 = vadd.f32 %v410, %v177
        %v443 = vadd.f32 %v411, %v177
        %v444 = vadd.f32 %v412, %v177
        %v445 = vadd.f32 %v413, %v177
        %v446 = vadd.f32 %v414, %v177
        %v447 = vadd.f32 %v415, %v177
        %v448 = vadd.f32 %v416, %v177
        %v449 = vadd.f32 %v417, %v177
        %v450 = vadd.f32 %v418, %v177
        %v451 = vadd.f32 %v419, %v177
        %v452 = vadd.f32 %v420, %v177
        %v453 = vadd.f32 %v421, %v177
        %v454 = vadd.f32 %v422, %v177
        %v455 = vadd.f32 %v423, %v177
        %v456 = vadd.f32 %v424, %v177
        %v457 = vadd.f32 %v425, %v177
        %v458 = vadd.f32 %v426, %v177
        %v459 = vadd.f32 %v427, %v177
        %v460 = vadd.f32 %v428, %v177
        %v461 = vadd.f32 %v429, %v177
        %v462 = vadd.f32 %v430, %v177
        %v463 = vadd.f32 %v431, %v177
        %v464 = vadd.f32 %v432, %v177
        %v465 = vadd.f32 %v433, %v177
        %466 = vst [vmem:[%s164] sm:$0xff] %v434
        %467 = vst [vmem:[%s164 + $0x8] sm:$0xff] %v435
        %468 = vst [vmem:[%s164 + $0x10] sm:$0xff] %v436
        %469 = vst [vmem:[%s164 + $0x18] sm:$0xff] %v437
        %470 = vst [vmem:[%s164 + $0x20] sm:$0xff] %v438
        %471 = vst [vmem:[%s164 + $0x28] sm:$0xff] %v439
        %472 = vst [vmem:[%s164 + $0x30] sm:$0xff] %v440
        %473 = vst [vmem:[%s164 + $0x38] sm:$0xff] %v441
        %474 = vst [vmem:[%s164 + $0x40] sm:$0xff] %v442
        %475 = vst [vmem:[%s164 + $0x48] sm:$0xff] %v443
        %476 = vst [vmem:[%s164 + $0x50] sm:$0xff] %v444
        %477 = vst [vmem:[%s164 + $0x58] sm:$0xff] %v445
        %478 = vst [vmem:[%s164 + $0x60] sm:$0xff] %v446
        %479 = vst [vmem:[%s164 + $0x68] sm:$0xff] %v447
        %480 = vst [vmem:[%s164 + $0x70] sm:$0xff] %v448
        %481 = vst [vmem:[%s164 + $0x78] sm:$0xff] %v449
        %482 = vst [vmem:[%s164 + $0x80] sm:$0xff] %v450
        %483 = vst [vmem:[%s164 + $0x88] sm:$0xff] %v451
        %484 = vst [vmem:[%s164 + $0x90] sm:$0xff] %v452
        %485 = vst [vmem:[%s164 + $0x98] sm:$0xff] %v453
        %486 = vst [vmem:[%s164 + $0xa0] sm:$0xff] %v454
        %487 = vst [vmem:[%s164 + $0xa8] sm:$0xff] %v455
        %488 = vst [vmem:[%s164 + $0xb0] sm:$0xff] %v456
        %489 = vst [vmem:[%s164 + $0xb8] sm:$0xff] %v457
        %490 = vst [vmem:[%s164 + $0xc0] sm:$0xff] %v458
        %491 = vst [vmem:[%s164 + $0xc8] sm:$0xff] %v459
        %492 = vst [vmem:[%s164 + $0xd0] sm:$0xff] %v460
        %493 = vst [vmem:[%s164 + $0xd8] sm:$0xff] %v461
        %494 = vst [vmem:[%s164 + $0xe0] sm:$0xff] %v462
        %495 = vst [vmem:[%s164 + $0xe8] sm:$0xff] %v463
        %496 = vst [vmem:[%s164 + $0xf0] sm:$0xff] %v464
        %497 = vst [vmem:[%s164 + $0xf8] sm:$0xff] %v465
        %s498 = sand.u32 %s93, 1
        %s499 = scalar_lea.sflag [#allocation3], %s498
        %s500 = sand.u32 %s93, 1
        %s501 = smul.addr %s500, 256
        %s502 = scalar_lea.vmem [#allocation2], %s501
        // Predicated region
        $region33: #{tpu_custom_call.1} parent=31 // pred_check
          %p503 = pneg %p103
        $region34: #{tpu_custom_call.1} parent=31 // pred_check_branch
          %505 = sbr.rel (%p503) target = $region36
        $region35: #{tpu_custom_call.1} parent=31 // pred_region
          %s506 = smul.u32 32, %s17
          %s508 = ssub.s32 4096, 4096
          %509 = vsyncadd %s499, %s508
          %s510 = smul.addr %s506, 128
          %s511 = scalar_lea.hbm %s3, %s510
          %s512 = sshll.u32 %s502, 4
          %s513 = int_to_ptr.vmem [resolvable:$true] %s512
          %518 = dma.vmem_to_hbm [thread:$0]  %s513, 4096, %s511, %s499, 128, 128, 8
        $region36: #{tpu_custom_call.1} parent=31 // pred_fallthru
          _
      $region32: #{tpu_custom_call.1} parent=5 // pred_fallthru
        _
      %p519 = scmp.le.s32.totalorder 2, %s12
      // Predicated region
      $region37: #{tpu_custom_call.1} parent=5 // pred_check
        %p520 = pneg %p519
      $region38: #{tpu_custom_call.1} parent=5 // pred_check_branch
        %522 = sbr.rel (%p520) target = $region40
      $region39: #{tpu_custom_call.1} parent=5 // pred_region
        %s523 = ssub.s32 %s12, 2
        // Predicated region
        $region41: #{tpu_custom_call.1} parent=39 // pred_check
          %p524 = pneg %p109
        $region42: #{tpu_custom_call.1} parent=39 // pred_check_branch
          %526 = sbr.rel (%p524) target = $region44
        $region43: #{tpu_custom_call.1} parent=39 // pred_region
          %s527 = sand.u32 %s94, 1
          %s528 = scalar_lea.sflag [#allocation3], %s527
          %s529 = sand.u32 %s94, 1
          %s530 = smul.addr %s529, 256
          %s531 = scalar_lea.vmem [#allocation2], %s530
          %532 = dma.done %s528, 4096
        $region44: #{tpu_custom_call.1} parent=39 // pred_fallthru
          _
      $region40: #{tpu_custom_call.1} parent=5 // pred_fallthru
        _
    $region6: #{tpu_custom_call.1} parent=1 // loop_footer
      %s16 = sadd.s32 1, %s12
    $region7: #{tpu_custom_call.1} parent=1 // loop_footer_branch
      %11 = sbr.rel target = $region3
    $region8: #{tpu_custom_call.1} parent=1 // loop_exit
      _
    %533 = vsyncpa [#allocation3], 1
    %s534 = scalar_lea.sflag [#allocation3], 1
    %535 = vsyncpa %s534, 1

</llo_original>
